<compile_context>
chip_gen: v5e
topology: v5e:2x2
jax: 0.10.0
libtpu: 0.0.40
codegen_flags: <defaults>
</compile_context>

<pallas_src>
import functools
import math

import jax
import jax.numpy as jnp
from jax import lax
from jax.experimental import pallas as pl
from jax.experimental.pallas import tpu as pltpu

_LANE = 128


def _round_up(n, m):
    return ((n + m - 1) // m) * m


def _attend_heads(xq, wq, k, v, o_ref, *, heads, d_head, dp, fp):
    """Per-head attention given pre-projected K and V' = V @ WO.

    xq: (tq, F) query rows.      wq: (F, H*dp) fused, lane-padded WQ.
    k : (S, H*dp) projected keys.  v: (S, H*fp) projected (V @ WO).
    o_ref: (tq, H*fp) lane-dense output slab.
    """
    cdtype = xq.dtype
    # Head-fused Q projection; fold 1/sqrt(d_k) into Q (tq*H*dp mults, not tq*S).
    q = jnp.dot(xq, wq, preferred_element_type=jnp.float32)          # (tq, H*dp)
    q = (q * (1.0 / math.sqrt(d_head))).astype(cdtype)

    trans_rhs = (((1,), (1,)), ((), ()))      # contract last dim of both operands
    for h in range(heads):                    # static unroll; slices 128-aligned
        qh = q[:, h * dp:(h + 1) * dp]
        kh = k[:, h * dp:(h + 1) * dp]
        vh = v[:, h * fp:(h + 1) * fp]

        # scores = qh @ kh.T without an explicit transpose relayout.
        s = lax.dot_general(qh, kh, trans_rhs,
                            preferred_element_type=jnp.float32)      # (tq, S)
        s = s - jnp.max(s, axis=-1, keepdims=True)
        p = jnp.exp(s)
        l = jnp.sum(p, axis=-1, keepdims=True)                       # (tq, 1)

        # Unnormalized PV matmul, then scale the small (tq, fp) result instead
        # of the (tq, S) probability matrix.
        acc = jnp.dot(p.astype(cdtype), vh,
                      preferred_element_type=jnp.float32)            # (tq, fp)
        acc = acc * pl.reciprocal(l)                                 # exact 1/l
        # 128-aligned, unmasked lane-dense store into the output slab.
        o_ref[:, h * fp:(h + 1) * fp] = acc.astype(o_ref.dtype)


def _mhsa_single_kernel(x_ref, wq_ref, wk_ref, wvo_ref, o_ref, *,
                        heads, d_head, dp, fp):
    # Single query tile: x serves as both query rows and K/V source.
    cdtype = x_ref.dtype
    x = x_ref[...]
    k = jnp.dot(x, wk_ref[...], preferred_element_type=jnp.float32).astype(cdtype)
    v = jnp.dot(x, wvo_ref[...], preferred_element_type=jnp.float32).astype(cdtype)
    _attend_heads(x, wq_ref[...], k, v, o_ref,
                  heads=heads, d_head=d_head, dp=dp, fp=fp)


def _mhsa_tiled_kernel(xq_ref, xkv_ref, wq_ref, wk_ref, wvo_ref, o_ref,
                       k_sc, v_sc, *, heads, d_head, dp, fp):
    cdtype = xq_ref.dtype

    # Project K and V' = V @ WO once (first grid step) into persistent VMEM
    # scratch; every subsequent query tile reuses them.
    @pl.when(pl.program_id(0) == 0)
    def _init_kv():
        xkv = xkv_ref[...]
        k_sc[...] = jnp.dot(xkv, wk_ref[...],
                            preferred_element_type=jnp.float32).astype(cdtype)
        v_sc[...] = jnp.dot(xkv, wvo_ref[...],
                            preferred_element_type=jnp.float32).astype(cdtype)

    _attend_heads(xq_ref[...], wq_ref[...], k_sc[...], v_sc[...], o_ref,
                  heads=heads, d_head=d_head, dp=dp, fp=fp)


def multi_head_self_dot_attention(x, WQ, WK, WV, WO, *, block_q=256):
    """x: [S, F]; WQ/WK/WV: [H, F, D]; WO: [H, F, F] (D == F). Returns [H, S, F]."""
    S, F = x.shape
    H, F_w, D = WQ.shape
    assert F_w == F and D == F and WO.shape == (H, F, F), \
        "reference semantics (attention_out @ WO) require D == F"

    # ---- one-time weight prep (outside the kernel) -------------------------
    # Fold WO into WV:  P @ V @ WO == P @ (x @ (WV @ WO)).
    WVO = jnp.einsum("hfd,hde->hfe", WV, WO,
                     precision=lax.Precision.HIGHEST)                 # (H, F, F)

    # Pad each head's lane dim to a multiple of 128 and fuse heads along the
    # last dim: per-head slices land on lane-tile boundaries and the score /
    # PV contractions are >=128 wide.  Padded columns are zero -> no effect.
    Dp = _round_up(D, _LANE)
    Fp = _round_up(F, _LANE)

    def fuse_heads(W, pad_to):                # (H, F, d) -> (F, H*pad_to)
        Wp = jnp.pad(W, ((0, 0), (0, 0), (0, pad_to - W.shape[-1])))
        return jnp.transpose(Wp, (1, 0, 2)).reshape(F, H * pad_to)

    wq_f = fuse_heads(WQ, Dp)
    wk_f = fuse_heads(WK, Dp)
    wvo_f = fuse_heads(WVO, Fp)

    out_dtype = x.dtype
    params = dict(heads=H, d_head=D, dp=Dp, fp=Fp)

    if S <= block_q:
        # Single query tile: one grid step, x passed once.
        S_pad = S
        kernel = functools.partial(_mhsa_single_kernel, **params)
        out_flat = pl.pallas_call(
            kernel,
            out_shape=jax.ShapeDtypeStruct((S, H * Fp), out_dtype),
            grid_spec=pltpu.PrefetchScalarGridSpec(
                num_scalar_prefetch=0,
                grid=(1,),
                in_specs=[
                    pl.BlockSpec((S, F), lambda i: (0, 0)),        # x
                    pl.BlockSpec((F, H * Dp), lambda i: (0, 0)),   # fused WQ
                    pl.BlockSpec((F, H * Dp), lambda i: (0, 0)),   # fused WK
                    pl.BlockSpec((F, H * Fp), lambda i: (0, 0)),   # fused WV@WO
                ],
                out_specs=pl.BlockSpec((S, H * Fp), lambda i: (0, 0)),
            ),
            compiler_params=pltpu.CompilerParams(
                dimension_semantics=("arbitrary",)),
        )(x, wq_f, wk_f, wvo_f)
    else:
        # Tile query rows; pad S up to a multiple of block_q.  Padded rows
        # attend to the real (unpadded) keys and are sliced off below, so they
        # do not perturb real outputs.
        tq = block_q
        S_pad = _round_up(S, tq)
        xq = jnp.pad(x, ((0, S_pad - S), (0, 0))) if S_pad != S else x
        kernel = functools.partial(_mhsa_tiled_kernel, **params)
        out_flat = pl.pallas_call(
            kernel,
            out_shape=jax.ShapeDtypeStruct((S_pad, H * Fp), out_dtype),
            grid_spec=pltpu.PrefetchScalarGridSpec(
                num_scalar_prefetch=0,
                grid=(S_pad // tq,),
                in_specs=[
                    pl.BlockSpec((tq, F), lambda i: (i, 0)),       # query tile
                    pl.BlockSpec((S, F), lambda i: (0, 0)),        # K/V source
                    pl.BlockSpec((F, H * Dp), lambda i: (0, 0)),   # fused WQ
                    pl.BlockSpec((F, H * Dp), lambda i: (0, 0)),   # fused WK
                    pl.BlockSpec((F, H * Fp), lambda i: (0, 0)),   # fused WV@WO
                ],
                out_specs=pl.BlockSpec((tq, H * Fp), lambda i: (i, 0)),
                scratch_shapes=[
                    pltpu.VMEM((S, H * Dp), x.dtype),              # cached K
                    pltpu.VMEM((S, H * Fp), x.dtype),              # cached V@WO
                ],
            ),
            # "arbitrary": the K/V scratch is initialized on step 0 and reused,
            # so the query axis must run sequentially on one core.
            # TODO(synk): per-core scratch init would re-enable v7x 2-TC split.
            compiler_params=pltpu.CompilerParams(
                dimension_semantics=("arbitrary",)),
        )(xq, x, wq_f, wk_f, wvo_f)

    # (S_pad, H*Fp) -> (H, S, F): strip query-row padding and per-head lane pad.
    out = out_flat.reshape(S_pad, H, Fp).transpose(1, 0, 2)
    return out[:, :S, :F]


def _reference(x, WQ, WK, WV, WO):
    hp = lax.Precision.HIGHEST
    xf = x.astype(jnp.float32)
    Q = jnp.einsum("sf,hfd->hsd", xf, WQ.astype(jnp.float32), precision=hp)
    K = jnp.einsum("sf,hfd->hsd", xf, WK.astype(jnp.float32), precision=hp)
    V = jnp.einsum("sf,hfd->hsd", xf, WV.astype(jnp.float32), precision=hp)
    d_k = Q.shape[-1]
    s = jnp.einsum("hqd,hkd->hqk", Q, K, precision=hp) / math.sqrt(d_k)
    p = jax.nn.softmax(s, axis=-1)
    attn = jnp.einsum("hqk,hkd->hqd", p, V, precision=hp)
    return jnp.einsum("hqd,hde->hqe", attn, WO.astype(jnp.float32), precision=hp)


if __name__ == "__main__":
    key = jax.random.PRNGKey(0)
    kx, kq, kk, kv, ko, kx2 = jax.random.split(key, 6)

    # Small shapes consistent with the module: seq=8, feature=32, heads=2, dim=32.
    S, F, H = 8, 32, 2
    D = F  # required by the final attention_out @ WO matmul in the reference

    x = jax.random.normal(kx, (S, F), dtype=jnp.float32)
    # torch.rand -> uniform [0, 1)
    WQ = jax.random.uniform(kq, (H, F, D), dtype=jnp.float32)
    WK = jax.random.uniform(kk, (H, F, D), dtype=jnp.float32)
    WV = jax.random.uniform(kv, (H, F, D), dtype=jnp.float32)
    WO = jax.random.uniform(ko, (H, F, F), dtype=jnp.float32)

    out = jax.block_until_ready(multi_head_self_dot_attention(x, WQ, WK, WV, WO))
    ref = _reference(x, WQ, WK, WV, WO)
    assert out.shape == (H, S, F), out.shape
    assert jnp.allclose(out, ref, rtol=1e-2, atol=1e-3), \
        float(jnp.max(jnp.abs(out - ref)))

    # Also exercise the tiled path (query tiling + persistent K/V scratch +
    # query-row padding: S=384 -> padded to 512 with block_q=256).
    S2 = 384
    x2 = jax.random.normal(kx2, (S2, F), dtype=jnp.float32)
    out2 = jax.block_until_ready(
        multi_head_self_dot_attention(x2, WQ, WK, WV, WO, block_q=256))
    ref2 = _reference(x2, WQ, WK, WV, WO)
    assert out2.shape == (H, S2, F), out2.shape
    assert jnp.allclose(out2, ref2, rtol=1e-2, atol=1e-2), \
        float(jnp.max(jnp.abs(out2 - ref2)))

    print("KERNEL_OK")
</pallas_src>

<mosaic_0001>
module attributes {stable_mosaic.version = 11 : i64} {
  func.func @_mhsa_single_kernel(%arg0: i32, %arg1: memref<8x32xf32, #tpu.memory_space<vmem>>, %arg2: memref<32x256xf32, #tpu.memory_space<vmem>>, %arg3: memref<32x256xf32, #tpu.memory_space<vmem>>, %arg4: memref<32x256xf32, #tpu.memory_space<vmem>>, %arg5: memref<8x256xf32, #tpu.memory_space<vmem>>) attributes {dimension_semantics = [#tpu.dimension_semantics<arbitrary>], iteration_bounds = array<i64: 1>, scalar_prefetch = 0 : i64, scratch_operands = 0 : i64, tpu.core_type = #tpu.core_type<tc>, window_params = [{pipeline_mode = #tpu.pipeline_mode<synchronous>, transform_indices = @transform_0, window_bounds = array<i64: 8, 32>}, {pipeline_mode = #tpu.pipeline_mode<synchronous>, transform_indices = @transform_1, window_bounds = array<i64: 32, 256>}, {pipeline_mode = #tpu.pipeline_mode<synchronous>, transform_indices = @transform_2, window_bounds = array<i64: 32, 256>}, {pipeline_mode = #tpu.pipeline_mode<synchronous>, transform_indices = @transform_3, window_bounds = array<i64: 32, 256>}, {pipeline_mode = #tpu.pipeline_mode<synchronous>, transform_indices = @transform_4, window_bounds = array<i64: 8, 256>}]} {
    %c0 = arith.constant 0 : index
    %c0_0 = arith.constant 0 : index
    %0 = vector.load %arg1[%c0, %c0_0] : memref<8x32xf32, #tpu.memory_space<vmem>>, vector<8x32xf32>
    %c0_1 = arith.constant 0 : index
    %c0_2 = arith.constant 0 : index
    %1 = vector.load %arg3[%c0_1, %c0_2] : memref<32x256xf32, #tpu.memory_space<vmem>>, vector<32x256xf32>
    %cst = arith.constant dense<0.000000e+00> : vector<8x256xf32>
    %2 = tpu.matmul %0, %1, %cst {dimension_numbers = #tpu.dot_dimension_numbers<[1], [0], [0], [1], [0, 0, 1, 1], [], []>} : vector<8x32xf32>, vector<32x256xf32>, vector<8x256xf32> -> vector<8x256xf32>
    %c0_3 = arith.constant 0 : index
    %c0_4 = arith.constant 0 : index
    %3 = vector.load %arg4[%c0_3, %c0_4] : memref<32x256xf32, #tpu.memory_space<vmem>>, vector<32x256xf32>
    %cst_5 = arith.constant dense<0.000000e+00> : vector<8x256xf32>
    %4 = tpu.matmul %0, %3, %cst_5 {dimension_numbers = #tpu.dot_dimension_numbers<[1], [0], [0], [1], [0, 0, 1, 1], [], []>} : vector<8x32xf32>, vector<32x256xf32>, vector<8x256xf32> -> vector<8x256xf32>
    %c0_6 = arith.constant 0 : index
    %c0_7 = arith.constant 0 : index
    %5 = vector.load %arg2[%c0_6, %c0_7] : memref<32x256xf32, #tpu.memory_space<vmem>>, vector<32x256xf32>
    %cst_8 = arith.constant dense<0.000000e+00> : vector<8x256xf32>
    %6 = tpu.matmul %0, %5, %cst_8 {dimension_numbers = #tpu.dot_dimension_numbers<[1], [0], [0], [1], [0, 0, 1, 1], [], []>} : vector<8x32xf32>, vector<32x256xf32>, vector<8x256xf32> -> vector<8x256xf32>
    %cst_9 = arith.constant 0.176776692 : f32
    %7 = vector.broadcast %cst_9 : f32 to vector<8x256xf32>
    %8 = arith.mulf %6, %7 : vector<8x256xf32>
    %9 = vector.extract_strided_slice %8 {offsets = [0, 0], sizes = [8, 128], strides = [1, 1]} : vector<8x256xf32> to vector<8x128xf32>
    %10 = vector.extract_strided_slice %2 {offsets = [0, 0], sizes = [8, 128], strides = [1, 1]} : vector<8x256xf32> to vector<8x128xf32>
    %11 = vector.extract_strided_slice %4 {offsets = [0, 0], sizes = [8, 128], strides = [1, 1]} : vector<8x256xf32> to vector<8x128xf32>
    %cst_10 = arith.constant dense<0.000000e+00> : vector<8x8xf32>
    %12 = tpu.matmul %9, %10, %cst_10 {dimension_numbers = #tpu.dot_dimension_numbers<[1], [1], [0], [0], [0, 0, 1, 0], [], []>} : vector<8x128xf32>, vector<8x128xf32>, vector<8x8xf32> -> vector<8x8xf32>
    %cst_11 = arith.constant dense<0xFF800000> : vector<8xf32>
    %13 = vector.multi_reduction <maximumf>, %12, %cst_11 [1] : vector<8x8xf32> to vector<8xf32>
    %14 = vector.shape_cast %13 : vector<8xf32> to vector<8x1xf32>
    %15 = vector.broadcast %14 : vector<8x1xf32> to vector<8x8xf32>
    %16 = arith.subf %12, %15 : vector<8x8xf32>
    %17 = math.exp %16 : vector<8x8xf32>
    %cst_12 = arith.constant dense<0.000000e+00> : vector<8xf32>
    %18 = vector.multi_reduction <add>, %17, %cst_12 [1] : vector<8x8xf32> to vector<8xf32>
    %19 = vector.shape_cast %18 : vector<8xf32> to vector<8x1xf32>
    %cst_13 = arith.constant dense<0.000000e+00> : vector<8x128xf32>
    %20 = tpu.matmul %17, %11, %cst_13 {dimension_numbers = #tpu.dot_dimension_numbers<[1], [0], [0], [1], [0, 0, 1, 1], [], []>} : vector<8x8xf32>, vector<8x128xf32>, vector<8x128xf32> -> vector<8x128xf32>
    %21 = tpu.reciprocal %19 : vector<8x1xf32> -> vector<8x1xf32>
    %22 = vector.broadcast %21 : vector<8x1xf32> to vector<8x128xf32>
    %23 = arith.mulf %20, %22 : vector<8x128xf32>
    %c0_14 = arith.constant 0 : index
    %c0_15 = arith.constant 0 : index
    %24 = vector.load %arg5[%c0_14, %c0_15] : memref<8x256xf32, #tpu.memory_space<vmem>>, vector<8x128xf32>
    tpu.vector_store %arg5[%c0_14, %c0_15], %23 {strides = array<i32>} : memref<8x256xf32, #tpu.memory_space<vmem>>, vector<8x128xf32>,
    %25 = vector.extract_strided_slice %8 {offsets = [0, 128], sizes = [8, 128], strides = [1, 1]} : vector<8x256xf32> to vector<8x128xf32>
    %26 = vector.extract_strided_slice %2 {offsets = [0, 128], sizes = [8, 128], strides = [1, 1]} : vector<8x256xf32> to vector<8x128xf32>
    %27 = vector.extract_strided_slice %4 {offsets = [0, 128], sizes = [8, 128], strides = [1, 1]} : vector<8x256xf32> to vector<8x128xf32>
    %cst_16 = arith.constant dense<0.000000e+00> : vector<8x8xf32>
    %28 = tpu.matmul %25, %26, %cst_16 {dimension_numbers = #tpu.dot_dimension_numbers<[1], [1], [0], [0], [0, 0, 1, 0], [], []>} : vector<8x128xf32>, vector<8x128xf32>, vector<8x8xf32> -> vector<8x8xf32>
    %cst_17 = arith.constant dense<0xFF800000> : vector<8xf32>
    %29 = vector.multi_reduction <maximumf>, %28, %cst_17 [1] : vector<8x8xf32> to vector<8xf32>
    %30 = vector.shape_cast %29 : vector<8xf32> to vector<8x1xf32>
    %31 = vector.broadcast %30 : vector<8x1xf32> to vector<8x8xf32>
    %32 = arith.subf %28, %31 : vector<8x8xf32>
    %33 = math.exp %32 : vector<8x8xf32>
    %cst_18 = arith.constant dense<0.000000e+00> : vector<8xf32>
    %34 = vector.multi_reduction <add>, %33, %cst_18 [1] : vector<8x8xf32> to vector<8xf32>
    %35 = vector.shape_cast %34 : vector<8xf32> to vector<8x1xf32>
    %cst_19 = arith.constant dense<0.000000e+00> : vector<8x128xf32>
    %36 = tpu.matmul %33, %27, %cst_19 {dimension_numbers = #tpu.dot_dimension_numbers<[1], [0], [0], [1], [0, 0, 1, 1], [], []>} : vector<8x8xf32>, vector<8x128xf32>, vector<8x128xf32> -> vector<8x128xf32>
    %37 = tpu.reciprocal %35 : vector<8x1xf32> -> vector<8x1xf32>
    %38 = vector.broadcast %37 : vector<8x1xf32> to vector<8x128xf32>
    %39 = arith.mulf %36, %38 : vector<8x128xf32>
    %c0_20 = arith.constant 0 : index
    %c128 = arith.constant 128 : index
    %40 = vector.load %arg5[%c0_20, %c128] : memref<8x256xf32, #tpu.memory_space<vmem>>, vector<8x128xf32>
    tpu.vector_store %arg5[%c0_20, %c128], %39 {strides = array<i32>} : memref<8x256xf32, #tpu.memory_space<vmem>>, vector<8x128xf32>,
    return
  }
  func.func @transform_0(%arg0: i32) -> (i32, i32) {
    %c0_i32 = arith.constant 0 : i32
    %c0_i32_0 = arith.constant 0 : i32
    %c0_i32_1 = arith.constant 0 : i32
    return %c0_i32, %c0_i32_0 : i32, i32
  }
  func.func @transform_1(%arg0: i32) -> (i32, i32) {
    %c0_i32 = arith.constant 0 : i32
    %c0_i32_0 = arith.constant 0 : i32
    %c0_i32_1 = arith.constant 0 : i32
    return %c0_i32, %c0_i32_0 : i32, i32
  }
  func.func @transform_2(%arg0: i32) -> (i32, i32) {
    %c0_i32 = arith.constant 0 : i32
    %c0_i32_0 = arith.constant 0 : i32
    %c0_i32_1 = arith.constant 0 : i32
    return %c0_i32, %c0_i32_0 : i32, i32
  }
  func.func @transform_3(%arg0: i32) -> (i32, i32) {
    %c0_i32 = arith.constant 0 : i32
    %c0_i32_0 = arith.constant 0 : i32
    %c0_i32_1 = arith.constant 0 : i32
    return %c0_i32, %c0_i32_0 : i32, i32
  }
  func.func @transform_4(%arg0: i32) -> (i32, i32) {
    %c0_i32 = arith.constant 0 : i32
    %c0_i32_0 = arith.constant 0 : i32
    %c0_i32_1 = arith.constant 0 : i32
    return %c0_i32, %c0_i32_0 : i32, i32
  }
}

</mosaic_0001>

<llo_original>
// kernel: tpu_custom_call.1
$region0: #{tpu_custom_call.1}
  #allocation0 [shape = 'u32[]', space=smem, size = 0x4, offset = 0x4, fixed_abs, tag = 'smem constant byte address 0x4 - core index']
  #allocation1 [shape = 'u32[72,128]{1,0:T(1,128)}', space=vmem, size = 0x9000, scoped, tag = 'internal scratch']
  %s0 = inlined_call_operand.hbm [shape: f32[8,32], index: 0, kind: input, shape index: {}]
  %s1 = inlined_call_operand.hbm [shape: f32[32,256], index: 1, kind: input, shape index: {}]
  %s2 = inlined_call_operand.hbm [shape: f32[32,256], index: 2, kind: input, shape index: {}]
  %s3 = inlined_call_operand.hbm [shape: f32[32,256], index: 3, kind: input, shape index: {}]
  %s4 = inlined_call_operand.hbm [shape: f32[8,256], index: 4, kind: output, shape index: {}]
  %s5 = sld [smem:[#allocation0]]
  $region42: #{tpu_custom_call.1} parent=0
    _
  %s7 = ssub.s32 1, %s5
  %s8 = scalar_select 0, %s7, %s5
  $region1: #{tpu_custom_call.1} parent=0
    #allocation2 [shape = 'u8[4096]{0}', space=vmem, size = 0x1000, scoped, tag = 'input window, operand 0, single buffered']
    #allocation3 [shape = 's32[1]{0}', space=sflag, size = 0x4, scoped, tag = 'scoped memory for tpu_custom_call.1']
    #allocation4 [shape = 's32[1]{0}', space=sflag, size = 0x4, scoped, tag = 'scoped memory for tpu_custom_call.1']
    #allocation5 [shape = 'u8[32768]{0}', space=vmem, size = 0x8000, scoped, tag = 'input window, operand 1, single buffered']
    #allocation6 [shape = 's32[1]{0}', space=sflag, size = 0x4, scoped, tag = 'scoped memory for tpu_custom_call.1']
    #allocation7 [shape = 'u8[32768]{0}', space=vmem, size = 0x8000, scoped, tag = 'input window, operand 2, single buffered']
    #allocation8 [shape = 'u8[32768]{0}', space=vmem, size = 0x8000, scoped, tag = 'input window, operand 3, single buffered']
    #allocation9 [shape = 's32[1]{0}', space=sflag, size = 0x4, scoped, tag = 'scoped memory for tpu_custom_call.1']
    #allocation10 [shape = 'u8[8192]{0}', space=vmem, size = 0x2000, scoped, tag = 'output window, operand 0, single buffered']
    %9 = vsyncpa [#allocation3], 0
    %10 = vsyncpa [#allocation6], 0
    %11 = vsyncpa [#allocation9], 0
    %12 = vsyncpa [#allocation4], 0
    // Predicated region
    $region2: #{tpu_custom_call.1} parent=1 // pred_check
      _
    $region3: #{tpu_custom_call.1} parent=1 // pred_check_branch
      %14 = sbr.rel (0) target = $region5
    $region4: #{tpu_custom_call.1} parent=1 // pred_region
      %16 = vsyncadd [#allocation3], 0
      %s18 = sshll.u32 %s0, 4
      %s19 = int_to_ptr.hbm [resolvable:$true] %s18
      %s20 = sshll.u32 [#allocation2], 4
      %s21 = int_to_ptr.vmem [resolvable:$true] %s20
      %23 = dma.hbm_to_vmem [thread:$0]  %s19, 128, %s21, [#allocation3]
    $region5: #{tpu_custom_call.1} parent=1 // pred_fallthru
      _
    // Predicated region
    $region6: #{tpu_custom_call.1} parent=1 // pred_check
      _
    $region7: #{tpu_custom_call.1} parent=1 // pred_check_branch
      %25 = sbr.rel (0) target = $region9
    $region8: #{tpu_custom_call.1} parent=1 // pred_region
      %27 = vsyncadd [#allocation6], 0
      %s28 = sshll.u32 %s1, 4
      %s29 = int_to_ptr.hbm [resolvable:$true] %s28
      %s30 = sshll.u32 [#allocation5], 4
      %s31 = int_to_ptr.vmem [resolvable:$true] %s30
      %36 = dma.hbm_to_vmem [thread:$0]  %s29, 1024, %s31, [#allocation6], 256, 256, 16
    $region9: #{tpu_custom_call.1} parent=1 // pred_fallthru
      _
    // Predicated region
    $region10: #{tpu_custom_call.1} parent=1 // pred_check
      _
    $region11: #{tpu_custom_call.1} parent=1 // pred_check_branch
      %38 = sbr.rel (0) target = $region13
    $region12: #{tpu_custom_call.1} parent=1 // pred_region
      %40 = vsyncadd [#allocation6], 0
      %s41 = sshll.u32 %s2, 4
      %s42 = int_to_ptr.hbm [resolvable:$true] %s41
      %s43 = sshll.u32 [#allocation7], 4
      %s44 = int_to_ptr.vmem [resolvable:$true] %s43
      %49 = dma.hbm_to_vmem [thread:$0]  %s42, 1024, %s44, [#allocation6], 256, 256, 16
    $region13: #{tpu_custom_call.1} parent=1 // pred_fallthru
      _
    // Predicated region
    $region14: #{tpu_custom_call.1} parent=1 // pred_check
      _
    $region15: #{tpu_custom_call.1} parent=1 // pred_check_branch
      %51 = sbr.rel (0) target = $region17
    $region16: #{tpu_custom_call.1} parent=1 // pred_region
      %53 = vsyncadd [#allocation9], 0
      %s54 = sshll.u32 %s3, 4
      %s55 = int_to_ptr.hbm [resolvable:$true] %s54
      %s56 = sshll.u32 [#allocation8], 4
      %s57 = int_to_ptr.vmem [resolvable:$true] %s56
      %62 = dma.hbm_to_vmem [thread:$0]  %s55, 1024, %s57, [#allocation9], 256, 256, 16
    $region17: #{tpu_custom_call.1} parent=1 // pred_fallthru
      _
    // Predicated region
    $region18: #{tpu_custom_call.1} parent=1 // pred_check
      _
    $region19: #{tpu_custom_call.1} parent=1 // pred_check_branch
      %64 = sbr.rel (0) target = $region21
    $region20: #{tpu_custom_call.1} parent=1 // pred_region
      %66 = dma.done [#allocation3], 128
    $region21: #{tpu_custom_call.1} parent=1 // pred_fallthru
      _
    // Predicated region
    $region22: #{tpu_custom_call.1} parent=1 // pred_check
      _
    $region23: #{tpu_custom_call.1} parent=1 // pred_check_branch
      %68 = sbr.rel (0) target = $region25
    $region24: #{tpu_custom_call.1} parent=1 // pred_region
      %70 = dma.done [#allocation6], 1024
    $region25: #{tpu_custom_call.1} parent=1 // pred_fallthru
      _
    // Predicated region
    $region26: #{tpu_custom_call.1} parent=1 // pred_check
      _
    $region27: #{tpu_custom_call.1} parent=1 // pred_check_branch
      %72 = sbr.rel (0) target = $region29
    $region28: #{tpu_custom_call.1} parent=1 // pred_region
      %74 = dma.done [#allocation6], 1024
    $region29: #{tpu_custom_call.1} parent=1 // pred_fallthru
      _
    // Predicated region
    $region30: #{tpu_custom_call.1} parent=1 // pred_check
      _
    $region31: #{tpu_custom_call.1} parent=1 // pred_check_branch
      %76 = sbr.rel (0) target = $region33
    $region32: #{tpu_custom_call.1} parent=1 // pred_region
      %78 = dma.done [#allocation9], 1024
    $region33: #{tpu_custom_call.1} parent=1 // pred_fallthru
      _
    %v79 = vld [vmem:[#allocation2] sm:$0xff]
    %v80 = vld [vmem:[#allocation7] sm:$0xff]
    %v81 = vld [vmem:[#allocation7 + $0x8] sm:$0xff]
    %v82 = vld [vmem:[#allocation7 + $0x10] sm:$0xff]
    %v83 = vld [vmem:[#allocation7 + $0x18] sm:$0xff]
    %v84 = vld [vmem:[#allocation7 + $0x20] sm:$0xff]
    %v85 = vld [vmem:[#allocation7 + $0x28] sm:$0xff]
    %v86 = vld [vmem:[#allocation7 + $0x30] sm:$0xff]
    %v87 = vld [vmem:[#allocation7 + $0x38] sm:$0xff]
    %vm88 = vcmask 261120
    %v90 = vsel %vm88, %v79, 0
    %92 = vmatpush.msra.mxu0 0.0
    %93 = vmatpush.msra.mxu0 0.0
    %94 = vmatpush.msra.mxu0 0.0
    %95 = vmatpush.msra.mxu0 0.0
    %96 = vmatpush.msra.mxu0 0.0
    %97 = vmatpush.msra.mxu0 0.0
    %98 = vmatpush.msra.mxu0 0.0
    %99 = vmatpush.msra.mxu0 0.0
    %100 = vmatpush.msra.mxu0 0.0
    %101 = vmatpush.msra.mxu0 0.0
    %102 = vmatpush.msra.mxu0 0.0
    %103 = vmatpush.msra.mxu0 0.0
    %104 = vmatpush.msra.mxu0 %v86
    %105 = vmatpush.msra.mxu0 %v84
    %106 = vmatpush.msra.mxu0 %v82
    %107 = vmatpush.msra.mxu0 %v80
    %108 = vmatmul.f32.gmra.mxu0 %v90
    %v109 = vpop.f32.mrf.mxu0
    %v110 = vadd.f32 0.0, %v109
    %111 = vdwg.mxu0
    %112 = vmatpush.msra.mxu0 0.0
    %113 = vmatpush.msra.mxu0 0.0
    %114 = vmatpush.msra.mxu0 0.0
    %115 = vmatpush.msra.mxu0 0.0
    %116 = vmatpush.msra.mxu0 0.0
    %117 = vmatpush.msra.mxu0 0.0
    %118 = vmatpush.msra.mxu0 0.0
    %119 = vmatpush.msra.mxu0 0.0
    %120 = vmatpush.msra.mxu0 0.0
    %121 = vmatpush.msra.mxu0 0.0
    %122 = vmatpush.msra.mxu0 0.0
    %123 = vmatpush.msra.mxu0 0.0
    %124 = vmatpush.msra.mxu0 %v87
    %125 = vmatpush.msra.mxu0 %v85
    %126 = vmatpush.msra.mxu0 %v83
    %127 = vmatpush.msra.mxu0 %v81
    %128 = vmatmul.f32.gmra.mxu0 %v90
    %v129 = vpop.f32.mrf.mxu0
    %v130 = vadd.f32 0.0, %v129
    %131 = vdwg.mxu0
    %v132 = vld [vmem:[#allocation8] sm:$0xff]
    %v133 = vld [vmem:[#allocation8 + $0x8] sm:$0xff]
    %v134 = vld [vmem:[#allocation8 + $0x10] sm:$0xff]
    %v135 = vld [vmem:[#allocation8 + $0x18] sm:$0xff]
    %v136 = vld [vmem:[#allocation8 + $0x20] sm:$0xff]
    %v137 = vld [vmem:[#allocation8 + $0x28] sm:$0xff]
    %v138 = vld [vmem:[#allocation8 + $0x30] sm:$0xff]
    %v139 = vld [vmem:[#allocation8 + $0x38] sm:$0xff]
    %140 = vmatpush.msra.mxu0 0.0
    %141 = vmatpush.msra.mxu0 0.0
    %142 = vmatpush.msra.mxu0 0.0
    %143 = vmatpush.msra.mxu0 0.0
    %144 = vmatpush.msra.mxu0 0.0
    %145 = vmatpush.msra.mxu0 0.0
    %146 = vmatpush.msra.mxu0 0.0
    %147 = vmatpush.msra.mxu0 0.0
    %148 = vmatpush.msra.mxu0 0.0
    %149 = vmatpush.msra.mxu0 0.0
    %150 = vmatpush.msra.mxu0 0.0
    %151 = vmatpush.msra.mxu0 0.0
    %152 = vmatpush.msra.mxu0 %v138
    %153 = vmatpush.msra.mxu0 %v136
    %154 = vmatpush.msra.mxu0 %v134
    %155 = vmatpush.msra.mxu0 %v132
    %156 = vmatmul.f32.gmra.mxu0 %v90
    %v157 = vpop.f32.mrf.mxu0
    %v158 = vadd.f32 0.0, %v157
    %159 = vdwg.mxu0
    %160 = vmatpush.msra.mxu0 0.0
    %161 = vmatpush.msra.mxu0 0.0
    %162 = vmatpush.msra.mxu0 0.0
    %163 = vmatpush.msra.mxu0 0.0
    %164 = vmatpush.msra.mxu0 0.0
    %165 = vmatpush.msra.mxu0 0.0
    %166 = vmatpush.msra.mxu0 0.0
    %167 = vmatpush.msra.mxu0 0.0
    %168 = vmatpush.msra.mxu0 0.0
    %169 = vmatpush.msra.mxu0 0.0
    %170 = vmatpush.msra.mxu0 0.0
    %171 = vmatpush.msra.mxu0 0.0
    %172 = vmatpush.msra.mxu0 %v139
    %173 = vmatpush.msra.mxu0 %v137
    %174 = vmatpush.msra.mxu0 %v135
    %175 = vmatpush.msra.mxu0 %v133
    %176 = vmatmul.f32.gmra.mxu0 %v90
    %v177 = vpop.f32.mrf.mxu0
    %v178 = vadd.f32 0.0, %v177
    %179 = vdwg.mxu0
    %v180 = vld [vmem:[#allocation5] sm:$0xff]
    %v181 = vld [vmem:[#allocation5 + $0x8] sm:$0xff]
    %v182 = vld [vmem:[#allocation5 + $0x10] sm:$0xff]
    %v183 = vld [vmem:[#allocation5 + $0x18] sm:$0xff]
    %v184 = vld [vmem:[#allocation5 + $0x20] sm:$0xff]
    %v185 = vld [vmem:[#allocation5 + $0x28] sm:$0xff]
    %v186 = vld [vmem:[#allocation5 + $0x30] sm:$0xff]
    %v187 = vld [vmem:[#allocation5 + $0x38] sm:$0xff]
    %188 = vmatpush.msra.mxu0 0.0
    %189 = vmatpush.msra.mxu0 0.0
    %190 = vmatpush.msra.mxu0 0.0
    %191 = vmatpush.msra.mxu0 0.0
    %192 = vmatpush.msra.mxu0 0.0
    %193 = vmatpush.msra.mxu0 0.0
    %194 = vmatpush.msra.mxu0 0.0
    %195 = vmatpush.msra.mxu0 0.0
    %196 = vmatpush.msra.mxu0 0.0
    %197 = vmatpush.msra.mxu0 0.0
    %198 = vmatpush.msra.mxu0 0.0
    %199 = vmatpush.msra.mxu0 0.0
    %200 = vmatpush.msra.mxu0 %v186
    %201 = vmatpush.msra.mxu0 %v184
    %202 = vmatpush.msra.mxu0 %v182
    %203 = vmatpush.msra.mxu0 %v180
    %204 = vmatmul.f32.gmra.mxu0 %v90
    %v205 = vpop.f32.mrf.mxu0
    %v206 = vadd.f32 0.0, %v205
    %207 = vdwg.mxu0
    %208 = vmatpush.msra.mxu0 0.0
    %209 = vmatpush.msra.mxu0 0.0
    %210 = vmatpush.msra.mxu0 0.0
    %211 = vmatpush.msra.mxu0 0.0
    %212 = vmatpush.msra.mxu0 0.0
    %213 = vmatpush.msra.mxu0 0.0
    %214 = vmatpush.msra.mxu0 0.0
    %215 = vmatpush.msra.mxu0 0.0
    %216 = vmatpush.msra.mxu0 0.0
    %217 = vmatpush.msra.mxu0 0.0
    %218 = vmatpush.msra.mxu0 0.0
    %219 = vmatpush.msra.mxu0 0.0
    %220 = vmatpush.msra.mxu0 %v187
    %221 = vmatpush.msra.mxu0 %v185
    %222 = vmatpush.msra.mxu0 %v183
    %223 = vmatpush.msra.mxu0 %v181
    %224 = vmatmul.f32.gmra.mxu0 %v90
    %v225 = vpop.f32.mrf.mxu0
    %v226 = vadd.f32 0.0, %v225
    %227 = vdwg.mxu0
    %v228 = vmul.f32 %v206, 0.17677669
    %v229 = vmul.f32 %v226, 0.17677669
    %230 = vmatpush.xpose.msra.mxu0 0.0
    %231 = vmatpush.xpose.msra.mxu0 0.0
    %232 = vmatpush.xpose.msra.mxu0 0.0
    %233 = vmatpush.xpose.msra.mxu0 0.0
    %234 = vmatpush.xpose.msra.mxu0 0.0
    %235 = vmatpush.xpose.msra.mxu0 0.0
    %236 = vmatpush.xpose.msra.mxu0 0.0
    %237 = vmatpush.xpose.msra.mxu0 0.0
    %238 = vmatpush.xpose.msra.mxu0 0.0
    %239 = vmatpush.xpose.msra.mxu0 0.0
    %240 = vmatpush.xpose.msra.mxu0 0.0
    %241 = vmatpush.xpose.msra.mxu0 0.0
    %242 = vmatpush.xpose.msra.mxu0 0.0
    %243 = vmatpush.xpose.msra.mxu0 0.0
    %244 = vmatpush.xpose.msra.mxu0 0.0
    %245 = vmatpush.xpose.msra.mxu0 %v110
    %246 = vmatmul.f32.gmra.mxu0 %v228
    %v247 = vpop.f32.mrf.mxu0
    %v248 = vadd.f32 0.0, %v247
    %249 = vdwg.mxu0
    %vm250 = vcmask 64512
    %v251 = vsel %vm250, %v248, -inf
    %252 = vmax.xlane.f32.xlu0 %v251
    %v253 = vpop.xlane.xlu0 %252
    %v254 = vsub.f32 %v248, %v253
    %v255 = vmul.f32 %v254, 1.442695
    %v256 = vpow.pop %v255
    %v257 = vsel %vm250, %v256, 0.0
    %258 = vadd.xlane.f32.xlu0 %v257
    %v259 = vpop.xlane.xlu0 %258
    %v261 = vsel %vm250, %v256, 0
    %263 = vmatpush.msra.mxu0 0.0
    %264 = vmatpush.msra.mxu0 0.0
    %265 = vmatpush.msra.mxu0 0.0
    %266 = vmatpush.msra.mxu0 0.0
    %267 = vmatpush.msra.mxu0 0.0
    %268 = vmatpush.msra.mxu0 0.0
    %269 = vmatpush.msra.mxu0 0.0
    %270 = vmatpush.msra.mxu0 0.0
    %271 = vmatpush.msra.mxu0 0.0
    %272 = vmatpush.msra.mxu0 0.0
    %273 = vmatpush.msra.mxu0 0.0
    %274 = vmatpush.msra.mxu0 0.0
    %275 = vmatpush.msra.mxu0 0.0
    %276 = vmatpush.msra.mxu0 0.0
    %277 = vmatpush.msra.mxu0 0.0
    %278 = vmatpush.msra.mxu0 %v158
    %279 = vmatmul.f32.gmra.mxu0 %v261
    %v280 = vpop.f32.mrf.mxu0
    %v281 = vadd.f32 0.0, %v280
    %282 = vdwg.mxu0
    %v283 = vrcp.pop %v259
    %v284 = vmul.f32 %v259, %v283
    %v285 = vsub.f32 1.0, %v284
    %v286 = vmul.f32 %v283, %v285
    %v287 = vadd.f32 %v283, %v286
    %vm288 = vweird.f32 %v259
    %vm289 = vweird.f32 %v283
    %vm290 = vmor %vm288, %vm289
    %v291 = vsel %vm290, %v283, %v287
    %v292 = vand.u32 2147483647, %v259
    %vm293 = vcmp.eq.f32.partialorder %v292, 8.507059e+37
    %v294 = vand.u32 %v259, 2147483648
    %v295 = vor.u32 1.1754944e-38, %v294
    %v296 = vsel %vm293, %v295, %v291
    %v297 = vmul.f32 %v281, %v296
    %298 = vst [vmem:[#allocation10] sm:$0xff] %v297
    %299 = vmatpush.xpose.msra.mxu0 0.0
    %300 = vmatpush.xpose.msra.mxu0 0.0
    %301 = vmatpush.xpose.msra.mxu0 0.0
    %302 = vmatpush.xpose.msra.mxu0 0.0
    %303 = vmatpush.xpose.msra.mxu0 0.0
    %304 = vmatpush.xpose.msra.mxu0 0.0
    %305 = vmatpush.xpose.msra.mxu0 0.0
    %306 = vmatpush.xpose.msra.mxu0 0.0
    %307 = vmatpush.xpose.msra.mxu0 0.0
    %308 = vmatpush.xpose.msra.mxu0 0.0
    %309 = vmatpush.xpose.msra.mxu0 0.0
    %310 = vmatpush.xpose.msra.mxu0 0.0
    %311 = vmatpush.xpose.msra.mxu0 0.0
    %312 = vmatpush.xpose.msra.mxu0 0.0
    %313 = vmatpush.xpose.msra.mxu0 0.0
    %314 = vmatpush.xpose.msra.mxu0 %v130
    %315 = vmatmul.f32.gmra.mxu0 %v229
    %v316 = vpop.f32.mrf.mxu0
    %v317 = vadd.f32 0.0, %v316
    %318 = vdwg.mxu0
    %v319 = vsel %vm250, %v317, -inf
    %320 = vmax.xlane.f32.xlu0 %v319
    %v321 = vpop.xlane.xlu0 %320
    %v322 = vsub.f32 %v317, %v321
    %v323 = vmul.f32 %v322, 1.442695
    %v324 = vpow.pop %v323
    %v325 = vsel %vm250, %v324, 0.0
    %326 = vadd.xlane.f32.xlu0 %v325
    %v327 = vpop.xlane.xlu0 %326
    %v329 = vsel %vm250, %v324, 0
    %331 = vmatpush.msra.mxu0 0.0
    %332 = vmatpush.msra.mxu0 0.0
    %333 = vmatpush.msra.mxu0 0.0
    %334 = vmatpush.msra.mxu0 0.0
    %335 = vmatpush.msra.mxu0 0.0
    %336 = vmatpush.msra.mxu0 0.0
    %337 = vmatpush.msra.mxu0 0.0
    %338 = vmatpush.msra.mxu0 0.0
    %339 = vmatpush.msra.mxu0 0.0
    %340 = vmatpush.msra.mxu0 0.0
    %341 = vmatpush.msra.mxu0 0.0
    %342 = vmatpush.msra.mxu0 0.0
    %343 = vmatpush.msra.mxu0 0.0
    %344 = vmatpush.msra.mxu0 0.0
    %345 = vmatpush.msra.mxu0 0.0
    %346 = vmatpush.msra.mxu0 %v178
    %347 = vmatmul.f32.gmra.mxu0 %v329
    %v348 = vpop.f32.mrf.mxu0
    %v349 = vadd.f32 0.0, %v348
    %350 = vdwg.mxu0
    %v351 = vrcp.pop %v327
    %v352 = vmul.f32 %v327, %v351
    %v353 = vsub.f32 1.0, %v352
    %v354 = vmul.f32 %v351, %v353
    %v355 = vadd.f32 %v351, %v354
    %vm356 = vweird.f32 %v327
    %vm357 = vweird.f32 %v351
    %vm358 = vmor %vm356, %vm357
    %v359 = vsel %vm358, %v351, %v355
    %v360 = vand.u32 2147483647, %v327
    %vm361 = vcmp.eq.f32.partialorder %v360, 8.507059e+37
    %v362 = vand.u32 %v327, 2147483648
    %v363 = vor.u32 1.1754944e-38, %v362
    %v364 = vsel %vm361, %v363, %v359
    %v365 = vmul.f32 %v349, %v364
    %366 = vst [vmem:[#allocation10 + $0x8] sm:$0xff] %v365
    // Predicated region
    $region34: #{tpu_custom_call.1} parent=1 // pred_check
      _
    $region35: #{tpu_custom_call.1} parent=1 // pred_check_branch
      %368 = sbr.rel (0) target = $region37
    $region36: #{tpu_custom_call.1} parent=1 // pred_region
      %370 = vsyncadd [#allocation4], 0
      %s372 = sshll.u32 [#allocation10], 4
      %s373 = int_to_ptr.vmem [resolvable:$true] %s372
      %s374 = sshll.u32 %s4, 4
      %s375 = int_to_ptr.hbm [resolvable:$true] %s374
      %377 = dma.vmem_to_hbm [thread:$0]  %s373, 256, %s375, [#allocation4]
    $region37: #{tpu_custom_call.1} parent=1 // pred_fallthru
      _
    // Predicated region
    $region38: #{tpu_custom_call.1} parent=1 // pred_check
      _
    $region39: #{tpu_custom_call.1} parent=1 // pred_check_branch
      %379 = sbr.rel (0) target = $region41
    $region40: #{tpu_custom_call.1} parent=1 // pred_region
      %381 = dma.done [#allocation4], 256
    $region41: #{tpu_custom_call.1} parent=1 // pred_fallthru
      _
    %382 = vsyncpa [#allocation3], 1
    %383 = vsyncpa [#allocation6], 1
    %384 = vsyncpa [#allocation9], 1
    %385 = vsyncpa [#allocation4], 1

</llo_original>
